<compile_context>
chip_gen: v7x
topology: tpu7x:2x2x1
jax: 0.10.0
libtpu: 0.0.40
codegen_flags: <defaults>
</compile_context>

<pallas_src>
from functools import partial

import jax
import jax.numpy as jnp
import numpy as np
from jax.experimental import pallas as pl
from jax.experimental.pallas import tpu as pltpu

LANE = 128
# Explicit scoped-VMEM limit (don't rely on per-generation defaults) and the
# tile-sizing budget kept below it with headroom for compiler scratch.
_VMEM_LIMIT_BYTES = 32 * 1024 * 1024
_VMEM_TILE_BUDGET = 24 * 1024 * 1024


# ---------------------------------------------------------------------------
# Tile-size helpers
# ---------------------------------------------------------------------------

def _round_up(x, m):
    return (x + m - 1) // m * m


def _pick_row_tile(m):
    """Row tile for the 1x1 path: capped at 512 (v7x VMEM), divides m, and
    prefers >= 4 row tiles so each megacore TC gets >= 2 pipelined steps."""
    cands = [t for t in (512, 256, 128, 64, 32, 16, 8) if m % t == 0]
    if not cands:
        return m                                   # odd size: full-extent block
    four = [t for t in cands if m // t >= 4]
    if four:
        return max(four)
    two = [t for t in cands if m // t >= 2]
    return max(two) if two else max(cands)


def _pick_k_tile(cin):
    """Cin (K) tile for the 1x1 path: bounds per-step VMEM independently of
    Cin; the K grid axis is 'arbitrary' with an f32 accumulator."""
    if cin <= 512:
        return cin
    for t in (512, 256, 128):
        if cin % t == 0:
            return t
    return cin


def _pick_cout_tile(cout_padded):
    """Cout is pre-padded to a multiple of 128; prefer 256-wide output tiles
    (v6e/v7x 256x256 MXU) when they divide it, else 128 (lane width)."""
    return 256 if cout_padded % 256 == 0 else 128


def _pick_h_tile(n, h, w, cin, tn, in_bytes, out_bytes):
    """Output-row tile for the halo-tiled 3x3 path: largest divisor of H whose
    double-buffered blocks fit the VMEM budget, preferring >= 4 grid steps
    along (N * H-tiles) so megacore + pipelining both get work."""
    def vmem(th):
        inp = (th + 2) * (w + 2) * cin * in_bytes      # input halo block
        wgt = 9 * cin * tn * in_bytes                  # weight tile
        out = th * w * tn * out_bytes                  # output tile
        acc = th * w * tn * 4                          # f32 accumulator
        tap = th * w * cin * in_bytes                  # per-tap working slice
        return 2 * (inp + wgt + out) + acc + 2 * tap   # x2 = double buffering
    divs = [d for d in range(h, 0, -1) if h % d == 0]
    fitting = [d for d in divs if vmem(d) <= _VMEM_TILE_BUDGET] or [divs[-1]]
    good = [d for d in fitting if (h // d) * n >= 4]
    return max(good or fitting)


# ---------------------------------------------------------------------------
# Pallas kernels
# ---------------------------------------------------------------------------

def _pw_conv_bn_silu_kernel(x_ref, w_ref, s_ref, b_ref, o_ref, acc_ref):
    """1x1 conv tile: (tm, tk) x (tk, tn) matmul accumulated over the K grid
    axis in an f32 VMEM scratch, folded-BN + SiLU epilogue on the last K step.

    x_ref: (TM, TK)   row tile of the flattened N*H*W activations
    w_ref: (TK, TN)   Cin/Cout tile of the weights
    s_ref, b_ref: (1, TN) folded BN scale / bias (f32)
    o_ref: (TM, TN);  acc_ref: (TM, TN) f32 scratch
    """
    @pl.when(pl.program_id(2) == 0)
    def _():
        acc_ref[...] = jnp.zeros_like(acc_ref)

    acc_ref[...] += jnp.dot(x_ref[...], w_ref[...],
                            preferred_element_type=jnp.float32)

    @pl.when(pl.program_id(2) == pl.num_programs(2) - 1)
    def _():
        y = acc_ref[...] * s_ref[...] + b_ref[...]
        # SiLU in f32; sigmoid lowers to the EUP slot (free under the MXU).
        o_ref[...] = (y * jax.nn.sigmoid(y)).astype(o_ref.dtype)


def _conv3x3_bn_silu_kernel(x_ref, w_ref, s_ref, b_ref, o_ref, *, TH, W, Cin):
    """3x3 stride-1 pad-1 conv on one (TH output rows x W) halo tile.

    x_ref: (1, TH+2, W+2, Cin)  padded input rows for this tile (2-row halo)
    w_ref: (9, Cin, TN)         per-tap (dy, dx) weights, Cout tile
    s_ref, b_ref: (1, TN)       folded BN scale / bias (f32)
    o_ref: (1, TH*W, TN)

    9 accumulating K=Cin MXU matmuls into an f32 accumulator — no materialized
    9x im2col patch, no lane-axis concatenate.
    """
    xw = x_ref[0]                                       # (TH+2, W+2, Cin)
    tn = o_ref.shape[-1]
    acc = jnp.zeros((TH * W, tn), jnp.float32)
    for t in range(9):
        dy, dx = divmod(t, 3)
        tap = xw[dy:dy + TH, dx:dx + W, :].reshape(TH * W, Cin)
        acc = acc + jnp.dot(tap, w_ref[t], preferred_element_type=jnp.float32)
    y = acc * s_ref[...] + b_ref[...]
    o_ref[0] = (y * jax.nn.sigmoid(y)).astype(o_ref.dtype)


# ---------------------------------------------------------------------------
# Wrappers (glue: reshape / pad / pallas_call setup)
# ---------------------------------------------------------------------------

def conv1x1_bn_silu(x_nhwc, w_hwio, scale, bias, compute_dtype):
    N, H, W, Cin = x_nhwc.shape
    Cout = w_hwio.shape[-1]
    Cout_p = _round_up(Cout, LANE)                     # lane-dense stores
    M = N * H * W
    cd = compute_dtype

    x2 = x_nhwc.reshape(M, Cin).astype(cd)
    w2 = w_hwio.reshape(Cin, Cout).astype(cd)
    if Cout_p != Cout:
        w2 = jnp.pad(w2, ((0, 0), (0, Cout_p - Cout)))
        scale = jnp.pad(scale, ((0, 0), (0, Cout_p - Cout)))
        bias = jnp.pad(bias, ((0, 0), (0, Cout_p - Cout)))

    tm = _pick_row_tile(M)
    tn = _pick_cout_tile(Cout_p)
    tk = _pick_k_tile(Cin)
    grid = (M // tm, Cout_p // tn, Cin // tk)

    out = pl.pallas_call(
        _pw_conv_bn_silu_kernel,
        out_shape=jax.ShapeDtypeStruct((M, Cout_p), x_nhwc.dtype),
        grid=grid,
        in_specs=[
            pl.BlockSpec((tm, tk), lambda i, j, k: (i, k)),
            pl.BlockSpec((tk, tn), lambda i, j, k: (k, j)),
            pl.BlockSpec((1, tn), lambda i, j, k: (0, j)),
            pl.BlockSpec((1, tn), lambda i, j, k: (0, j)),
        ],
        out_specs=pl.BlockSpec((tm, tn), lambda i, j, k: (i, j)),
        scratch_shapes=[pltpu.VMEM((tm, tn), jnp.float32)],
        compiler_params=pltpu.CompilerParams(
            dimension_semantics=("parallel", "parallel", "arbitrary"),
            vmem_limit_bytes=_VMEM_LIMIT_BYTES),
    )(x2, w2, scale, bias)
    return out[:, :Cout].reshape(N, H, W, Cout)


def conv3x3_bn_silu(x_nhwc, w_hwio, scale, bias, compute_dtype):
    N, H, W, Cin = x_nhwc.shape
    Cout = w_hwio.shape[-1]
    Cout_p = _round_up(Cout, LANE)                     # lane-dense stores
    cd = compute_dtype
    in_b = jnp.dtype(cd).itemsize
    out_b = jnp.dtype(x_nhwc.dtype).itemsize

    tn = _pick_cout_tile(Cout_p)
    TH = _pick_h_tile(N, H, W, Cin, tn, in_b, out_b)
    nH = H // TH

    # pad = autopad(3) = 1; materialize overlapping (TH+2)-row halo slabs so
    # plain blocked BlockSpecs give non-overlapping, fully auto-pipelined input
    # blocks with bounded VMEM.
    # TODO(synk): feed the halo via an element-indexed BlockSpec (pl.Element on
    # the H dim) or a manual double-buffered make_async_copy to drop this
    # extra ~(TH+2)/TH activation pass through HBM.
    xp = jnp.pad(x_nhwc, ((0, 0), (1, 1), (1, 1), (0, 0))).astype(cd)
    rows = jnp.arange(nH)[:, None] * TH + jnp.arange(TH + 2)[None, :]
    xt = xp[:, rows].reshape(N * nH, TH + 2, W + 2, Cin)

    w9 = w_hwio.reshape(9, Cin, Cout).astype(cd)       # tap-major (dy, dx)
    if Cout_p != Cout:
        w9 = jnp.pad(w9, ((0, 0), (0, 0), (0, Cout_p - Cout)))
        scale = jnp.pad(scale, ((0, 0), (0, Cout_p - Cout)))
        bias = jnp.pad(bias, ((0, 0), (0, Cout_p - Cout)))

    grid = (N * nH, Cout_p // tn)
    kernel = partial(_conv3x3_bn_silu_kernel, TH=TH, W=W, Cin=Cin)
    out = pl.pallas_call(
        kernel,
        out_shape=jax.ShapeDtypeStruct((N * nH, TH * W, Cout_p), x_nhwc.dtype),
        grid=grid,
        in_specs=[
            pl.BlockSpec((1, TH + 2, W + 2, Cin), lambda i, j: (i, 0, 0, 0)),
            pl.BlockSpec((9, Cin, tn), lambda i, j: (0, 0, j)),
            pl.BlockSpec((1, tn), lambda i, j: (0, j)),
            pl.BlockSpec((1, tn), lambda i, j: (0, j)),
        ],
        out_specs=pl.BlockSpec((1, TH * W, tn), lambda i, j: (i, 0, j)),
        compiler_params=pltpu.CompilerParams(
            dimension_semantics=("parallel", "parallel"),
            vmem_limit_bytes=_VMEM_LIMIT_BYTES),
    )(xt, w9, scale, bias)
    return out.reshape(N, H, W, Cout_p)[..., :Cout]


# ---------------------------------------------------------------------------
# Conv.forward equivalent (NCHW in / NCHW out, like the PyTorch module)
# ---------------------------------------------------------------------------

def conv_forward(x_nchw, w_hwio, scale, bias, compute_dtype=jnp.bfloat16):
    """SiLU(BN(Conv2d(x))) with bias=False, stride 1, pad=autopad(k), g=d=1.

    Default compute dtype is bf16 (activations/weights) with f32 MXU
    accumulation and an f32 BN+SiLU epilogue (v6e/v7x sweet spot; v5e's MXU
    also takes bf16 while its epilogue stays f32).  Pass jnp.float32 for
    bit-tighter numerics.
    """
    # TODO(synk): stride>1, groups>1, dilation>1 and non-SiLU act not implemented.
    k = w_hwio.shape[0]
    x_nhwc = jnp.transpose(x_nchw, (0, 2, 3, 1))
    if k == 1:
        y = conv1x1_bn_silu(x_nhwc, w_hwio, scale, bias, compute_dtype)
    elif k == 3:
        y = conv3x3_bn_silu(x_nhwc, w_hwio, scale, bias, compute_dtype)
    else:
        raise NotImplementedError(f"kernel size {k} not supported")
    return jnp.transpose(y, (0, 3, 1, 2))


def conv_reference(x_nchw, w_hwio, scale, bias):
    """Pure-JAX reference: conv + folded-BN + SiLU."""
    k = w_hwio.shape[0]
    p = k // 2
    x = jnp.transpose(x_nchw, (0, 2, 3, 1))
    y = jax.lax.conv_general_dilated(
        x, w_hwio, window_strides=(1, 1), padding=[(p, p), (p, p)],
        dimension_numbers=("NHWC", "HWIO", "NHWC"))
    y = y * scale.reshape(1, 1, 1, -1) + bias.reshape(1, 1, 1, -1)
    y = y * jax.nn.sigmoid(y)
    return jnp.transpose(y, (0, 3, 1, 2))


# ---------------------------------------------------------------------------
# Deterministic parameter init (shapes follow the PyTorch module __init__)
# ---------------------------------------------------------------------------

def init_conv_params(key, cin, cout, k):
    kw, kg, kb, km, kv = jax.random.split(key, 5)
    w = jax.random.normal(kw, (k, k, cin, cout), jnp.float32) * (cin * k * k) ** -0.5
    gamma = jax.random.uniform(kg, (cout,), jnp.float32, 0.5, 1.5)
    beta = jax.random.normal(kb, (cout,), jnp.float32) * 0.1
    mean = jax.random.normal(km, (cout,), jnp.float32) * 0.1
    var = jax.random.uniform(kv, (cout,), jnp.float32, 0.5, 1.5)
    eps = 1e-5                                          # nn.BatchNorm2d default
    scale = gamma / jnp.sqrt(var + eps)
    bias = beta - mean * scale
    return w, scale.reshape(1, cout), bias.reshape(1, cout)


if __name__ == "__main__":
    key = jax.random.PRNGKey(0)
    k1, k2, kx = jax.random.split(key, 3)

    N, C1, H, W = 2, 4, 16, 16
    x = jax.random.normal(kx, (N, C1, H, W), jnp.float32)   # PyTorch NCHW input

    # Conv(c1=4, c2=32, k=1) — pointwise path (Cout padded 32 -> 128 internally)
    w1, s1, b1 = init_conv_params(k1, C1, 32, 1)
    ref1 = conv_reference(x, w1, s1, b1)
    out1 = jax.block_until_ready(
        conv_forward(x, w1, s1, b1, compute_dtype=jnp.float32))
    assert out1.shape == (N, 32, H, W)
    np.testing.assert_allclose(np.asarray(out1), np.asarray(ref1),
                               rtol=1e-4, atol=1e-4)

    # Conv(c1=4, c2=8, k=3) — halo-tiled 3x3 path, pad=autopad(3)=1
    w3, s3, b3 = init_conv_params(k2, C1, 8, 3)
    ref3 = conv_reference(x, w3, s3, b3)
    out3 = jax.block_until_ready(
        conv_forward(x, w3, s3, b3, compute_dtype=jnp.float32))
    assert out3.shape == (N, 8, H, W)
    np.testing.assert_allclose(np.asarray(out3), np.asarray(ref3),
                               rtol=1e-4, atol=1e-4)

    # Default bf16 compute path (v6e/v7x): bf16 activations/weights, f32 MXU
    # accumulate and f32 BN+SiLU epilogue (looser tolerance by construction).
    out1_bf16 = jax.block_until_ready(conv_forward(x, w1, s1, b1))
    np.testing.assert_allclose(np.asarray(out1_bf16), np.asarray(ref1),
                               rtol=2e-2, atol=5e-2)
    out3_bf16 = jax.block_until_ready(conv_forward(x, w3, s3, b3))
    np.testing.assert_allclose(np.asarray(out3_bf16), np.asarray(ref3),
                               rtol=2e-2, atol=5e-2)

    print("KERNEL_OK")
</pallas_src>

<mosaic_0001>
module attributes {stable_mosaic.version = 11 : i64} {
  func.func @_pw_conv_bn_silu_kernel(%arg0: i32, %arg1: i32, %arg2: i32, %arg3: memref<128x4xf32, #tpu.memory_space<vmem>>, %arg4: memref<4x128xf32, #tpu.memory_space<vmem>>, %arg5: memref<1x128xf32, #tpu.memory_space<vmem>>, %arg6: memref<1x128xf32, #tpu.memory_space<vmem>>, %arg7: memref<128x128xf32, #tpu.memory_space<vmem>>, %arg8: memref<128x128xf32, #tpu.memory_space<vmem>>) attributes {dimension_semantics = [#tpu.dimension_semantics<parallel>, #tpu.dimension_semantics<parallel>, #tpu.dimension_semantics<arbitrary>], iteration_bounds = array<i64: 4, 1, 1>, scalar_prefetch = 0 : i64, scratch_operands = 1 : i64, tpu.core_type = #tpu.core_type<tc>, window_params = [{transform_indices = @transform_0, window_bounds = array<i64: 128, 4>}, {transform_indices = @transform_1, window_bounds = array<i64: 4, 128>}, {transform_indices = @transform_2, window_bounds = array<i64: 1, 128>}, {transform_indices = @transform_3, window_bounds = array<i64: 1, 128>}, {transform_indices = @transform_4, window_bounds = array<i64: 128, 128>}]} {
    %c0_i32 = arith.constant 0 : i32
    %0 = arith.cmpi eq, %arg2, %c0_i32 : i32
    %1 = arith.extui %0 : i1 to i32
    %c0_i32_0 = arith.constant 0 : i32
    %2 = arith.cmpi ne, %1, %c0_i32_0 : i32
    scf.if %2 {
      %cst_10 = arith.constant 0.000000e+00 : f32
      %12 = vector.broadcast %cst_10 : f32 to vector<128x128xf32>
      %c0_11 = arith.constant 0 : index
      %c0_12 = arith.constant 0 : index
      %13 = vector.load %arg8[%c0_11, %c0_12] : memref<128x128xf32, #tpu.memory_space<vmem>>, vector<128x128xf32>
      tpu.vector_store %arg8[%c0_11, %c0_12], %12 {strides = array<i32>} : memref<128x128xf32, #tpu.memory_space<vmem>>, vector<128x128xf32>,
    } else {
    }
    %c0 = arith.constant 0 : index
    %c0_1 = arith.constant 0 : index
    %3 = vector.load %arg8[%c0, %c0_1] : memref<128x128xf32, #tpu.memory_space<vmem>>, vector<128x128xf32>
    %c0_2 = arith.constant 0 : index
    %c0_3 = arith.constant 0 : index
    %4 = vector.load %arg3[%c0_2, %c0_3] : memref<128x4xf32, #tpu.memory_space<vmem>>, vector<128x4xf32>
    %c0_4 = arith.constant 0 : index
    %c0_5 = arith.constant 0 : index
    %5 = vector.load %arg4[%c0_4, %c0_5] : memref<4x128xf32, #tpu.memory_space<vmem>>, vector<4x128xf32>
    %cst = arith.constant dense<0.000000e+00> : vector<128x128xf32>
    %6 = tpu.matmul %4, %5, %cst {dimension_numbers = #tpu.dot_dimension_numbers<[1], [0], [0], [1], [0, 0, 1, 1], [], []>} : vector<128x4xf32>, vector<4x128xf32>, vector<128x128xf32> -> vector<128x128xf32>
    %7 = arith.addf %3, %6 : vector<128x128xf32>
    %c0_6 = arith.constant 0 : index
    %c0_7 = arith.constant 0 : index
    %8 = vector.load %arg8[%c0_6, %c0_7] : memref<128x128xf32, #tpu.memory_space<vmem>>, vector<128x128xf32>
    tpu.vector_store %arg8[%c0_6, %c0_7], %7 {strides = array<i32>} : memref<128x128xf32, #tpu.memory_space<vmem>>, vector<128x128xf32>,
    %c0_i32_8 = arith.constant 0 : i32
    %9 = arith.cmpi eq, %arg2, %c0_i32_8 : i32
    %10 = arith.extui %9 : i1 to i32
    %c0_i32_9 = arith.constant 0 : i32
    %11 = arith.cmpi ne, %10, %c0_i32_9 : i32
    scf.if %11 {
      %c0_10 = arith.constant 0 : index
      %c0_11 = arith.constant 0 : index
      %12 = vector.load %arg8[%c0_10, %c0_11] : memref<128x128xf32, #tpu.memory_space<vmem>>, vector<128x128xf32>
      %c0_12 = arith.constant 0 : index
      %c0_13 = arith.constant 0 : index
      %13 = vector.load %arg5[%c0_12, %c0_13] : memref<1x128xf32, #tpu.memory_space<vmem>>, vector<1x128xf32>
      %14 = vector.broadcast %13 : vector<1x128xf32> to vector<128x128xf32>
      %15 = arith.mulf %12, %14 : vector<128x128xf32>
      %c0_14 = arith.constant 0 : index
      %c0_15 = arith.constant 0 : index
      %16 = vector.load %arg6[%c0_14, %c0_15] : memref<1x128xf32, #tpu.memory_space<vmem>>, vector<1x128xf32>
      %17 = vector.broadcast %16 : vector<1x128xf32> to vector<128x128xf32>
      %18 = arith.addf %15, %17 : vector<128x128xf32>
      %19 = arith.negf %18 : vector<128x128xf32>
      %20 = math.exp %19 : vector<128x128xf32>
      %cst_16 = arith.constant 1.000000e+00 : f32
      %21 = vector.broadcast %cst_16 : f32 to vector<128x128xf32>
      %22 = arith.addf %21, %20 : vector<128x128xf32>
      %23 = arith.divf %21, %22 : vector<128x128xf32>
      %24 = arith.mulf %18, %23 : vector<128x128xf32>
      %c0_17 = arith.constant 0 : index
      %c0_18 = arith.constant 0 : index
      %25 = vector.load %arg7[%c0_17, %c0_18] : memref<128x128xf32, #tpu.memory_space<vmem>>, vector<128x128xf32>
      tpu.vector_store %arg7[%c0_17, %c0_18], %24 {strides = array<i32>} : memref<128x128xf32, #tpu.memory_space<vmem>>, vector<128x128xf32>,
    } else {
    }
    return
  }
  func.func @transform_0(%arg0: i32, %arg1: i32, %arg2: i32) -> (i32, i32) {
    %c0_i32 = arith.constant 0 : i32
    return %arg0, %arg2 : i32, i32
  }
  func.func @transform_1(%arg0: i32, %arg1: i32, %arg2: i32) -> (i32, i32) {
    %c0_i32 = arith.constant 0 : i32
    return %arg2, %arg1 : i32, i32
  }
  func.func @transform_2(%arg0: i32, %arg1: i32, %arg2: i32) -> (i32, i32) {
    %c0_i32 = arith.constant 0 : i32
    %c0_i32_0 = arith.constant 0 : i32
    return %c0_i32, %arg1 : i32, i32
  }
  func.func @transform_3(%arg0: i32, %arg1: i32, %arg2: i32) -> (i32, i32) {
    %c0_i32 = arith.constant 0 : i32
    %c0_i32_0 = arith.constant 0 : i32
    return %c0_i32, %arg1 : i32, i32
  }
  func.func @transform_4(%arg0: i32, %arg1: i32, %arg2: i32) -> (i32, i32) {
    %c0_i32 = arith.constant 0 : i32
    return %arg0, %arg1 : i32, i32
  }
}

</mosaic_0001>

<llo_original>
// kernel: tpu_custom_call.1
$region0: #{tpu_custom_call.1}
  #allocation0 [shape = 'u32[]', space=smem, size = 0x4, offset = 0x4, fixed_abs, tag = 'smem constant byte address 0x4 - core index']
  #allocation1 [shape = 'u32[144,128]{1,0:T(1,128)}', space=vmem, size = 0x12000, scoped, tag = 'internal scratch']
  #allocation2 [shape = 'f32[128,128]{1,0:T(8,128)}', space=vmem, size = 0x10000, scoped, tag = 'scratch operand']
  %s0 = inlined_call_operand.vmem [shape: f32[512,4], index: 0, kind: input, shape index: {}]
  %s1 = inlined_call_operand.vmem [shape: f32[4,128], index: 1, kind: input, shape index: {}]
  %s2 = inlined_call_operand.vmem [shape: f32[1,128], index: 2, kind: input, shape index: {}]
  %s3 = inlined_call_operand.vmem [shape: f32[1,128], index: 3, kind: input, shape index: {}]
  %s4 = inlined_call_operand.hbm [shape: f32[512,128], index: 4, kind: output, shape index: {}]
  %s5 = sld [smem:[#allocation0]]
  $region57: #{tpu_custom_call.1} parent=0
    _
  %s7 = ssub.s32 1, %s5
  %s8 = scalar_select 0, %s7, %s5
  $region1: #{tpu_custom_call.1} parent=0
    #allocation3 [shape = 'u8[131072]{0}', space=vmem, size = 0x20000, scoped, tag = 'output window, operand 0']
    #allocation4 [shape = 's32[2]{0}', space=sflag, size = 0x8, scoped, tag = 'scoped memory for tpu_custom_call.1']
    %9 = vsyncpa [#allocation4], 0
    %s10 = scalar_lea.sflag [#allocation4], 1
    %11 = vsyncpa %s10, 0
    loop: start=0, step=1, limit=6
    $region2: #{tpu_custom_call.1} parent=1 // loop_pre_header
      _
    $region3: #{tpu_custom_call.1} parent=1 // loop_header
      %s13 = sphi 0, %s17
      %p14 = scmp.ge.s32.totalorder %s13, 6
      %s20 = sphi 0, %s39
      %s21 = sphi 0, %s35
      %s22 = sphi 0, %s31
      %s23 = sphi 0, %s20
      %s24 = sphi 0, %s21
      %s25 = sphi 0, %s22
      %s26 = sphi 0, %s23
      %s27 = sphi 0, %s24
      %s28 = sphi 0, %s25
      %s44 = sphi 0, %s46
      %s47 = sphi 0, %s44
      %s48 = sphi 0, %s47
      %s64 = sphi 0, %s48
      %s72 = sphi 0, %s74
      %s75 = sphi 0, %s72
      %s76 = sphi 0, %s75
      %s92 = sphi 0, %s76
      %s98 = sphi 0, %s100
      %s101 = sphi 0, %s98
      %s102 = sphi 0, %s101
      %s118 = sphi 0, %s102
      %s124 = sphi 0, %s126
      %s127 = sphi 0, %s124
      %s128 = sphi 0, %s127
      %s144 = sphi 0, %s128
      %s152 = sphi 0, %s154
      %s155 = sphi 0, %s152
      %s156 = sphi 0, %s155
      %s172 = sphi 0, %s156
    $region4: #{tpu_custom_call.1} parent=1 // loop_header_branch
      %16 = sbr.rel (%p14) target = $region8
    $region5: #{tpu_custom_call.1} parent=1 // loop_body
      %s18 = ssub.s32 %s13, 1
      %s19 = ssub.s32 %s13, 2
      %s29 = sadd.s32 1, %s22
      %p30 = scmp.ge.s32.totalorder %s29, 1
      %s31 = scalar_select %p30, 0, %s29
      %s32 = sadd.s32 1, %s21
      %s33 = scalar_select %p30, %s32, %s21
      %p34 = scmp.ge.s32.totalorder %s33, 1
      %s35 = scalar_select %p34, 0, %s33
      %s36 = sadd.s32 1, %s20
      %s37 = scalar_select %p34, %s36, %s20
      %p38 = scmp.ge.s32.totalorder %s37, 4
      %s39 = scalar_select %p38, 0, %s37
      %s40 = ssub.s32 %s20, %s39
      %s41 = ssub.s32 %s22, %s31
      %s42 = sor.u32 %s40, %s41
      %p43 = scmp.eq.s32.totalorder %s42, 0
      %s45 = sadd.s32 %s44, 1
      %s46 = scalar_select %p43, %s44, %s45
      %p49 = pneg %p43
      %p50 = scmp.eq.s32.totalorder %s13, 3
      %p51 = por %p49, %p50
      %p52 = scmp.ne.s32.totalorder %s44, %s47
      %p53 = scmp.eq.s32.totalorder %s13, 0
      %p54 = por %p52, %p53
      %p55 = scmp.ne.s32.totalorder %s44, %s47
      %p56 = scmp.eq.s32.totalorder %s18, 3
      %p57 = por %p55, %p56
      %p58 = scmp.ne.s32.totalorder %s47, %s48
      %p59 = scmp.eq.s32.totalorder %s18, 0
      %p60 = por %p58, %p59
      %p61 = scmp.ne.s32.totalorder %s47, %s48
      %p62 = scmp.eq.s32.totalorder %s19, 3
      %p63 = por %p61, %p62
      %p65 = scmp.ne.s32.totalorder %s48, %s64
      %p66 = scmp.eq.s32.totalorder %s19, 0
      %p67 = por %p65, %p66
      %s68 = ssub.s32 %s22, %s31
      %s69 = ssub.s32 %s21, %s35
      %s70 = sor.u32 %s68, %s69
      %p71 = scmp.eq.s32.totalorder %s70, 0
      %s73 = sadd.s32 %s72, 1
      %s74 = scalar_select %p71, %s72, %s73
      %p77 = pneg %p71
      %p78 = scmp.eq.s32.totalorder %s13, 3
      %p79 = por %p77, %p78
      %p80 = scmp.ne.s32.totalorder %s72, %s75
      %p81 = scmp.eq.s32.totalorder %s13, 0
      %p82 = por %p80, %p81
      %p83 = scmp.ne.s32.totalorder %s72, %s75
      %p84 = scmp.eq.s32.totalorder %s18, 3
      %p85 = por %p83, %p84
      %p86 = scmp.ne.s32.totalorder %s75, %s76
      %p87 = scmp.eq.s32.totalorder %s18, 0
      %p88 = por %p86, %p87
      %p89 = scmp.ne.s32.totalorder %s75, %s76
      %p90 = scmp.eq.s32.totalorder %s19, 3
      %p91 = por %p89, %p90
      %p93 = scmp.ne.s32.totalorder %s76, %s92
      %p94 = scmp.eq.s32.totalorder %s19, 0
      %p95 = por %p93, %p94
      %s96 = ssub.s32 %s21, %s35
      %p97 = scmp.eq.s32.totalorder %s96, 0
      %s99 = sadd.s32 %s98, 1
      %s100 = scalar_select %p97, %s98, %s99
      %p103 = pneg %p97
      %p104 = scmp.eq.s32.totalorder %s13, 3
      %p105 = por %p103, %p104
      %p106 = scmp.ne.s32.totalorder %s98, %s101
      %p107 = scmp.eq.s32.totalorder %s13, 0
      %p108 = por %p106, %p107
      %p109 = scmp.ne.s32.totalorder %s98, %s101
      %p110 = scmp.eq.s32.totalorder %s18, 3
      %p111 = por %p109, %p110
      %p112 = scmp.ne.s32.totalorder %s101, %s102
      %p113 = scmp.eq.s32.totalorder %s18, 0
      %p114 = por %p112, %p113
      %p115 = scmp.ne.s32.totalorder %s101, %s102
      %p116 = scmp.eq.s32.totalorder %s19, 3
      %p117 = por %p115, %p116
      %p119 = scmp.ne.s32.totalorder %s102, %s118
      %p120 = scmp.eq.s32.totalorder %s19, 0
      %p121 = por %p119, %p120
      %s122 = ssub.s32 %s21, %s35
      %p123 = scmp.eq.s32.totalorder %s122, 0
      %s125 = sadd.s32 %s124, 1
      %s126 = scalar_select %p123, %s124, %s125
      %p129 = pneg %p123
      %p130 = scmp.eq.s32.totalorder %s13, 3
      %p131 = por %p129, %p130
      %p132 = scmp.ne.s32.totalorder %s124, %s127
      %p133 = scmp.eq.s32.totalorder %s13, 0
      %p134 = por %p132, %p133
      %p135 = scmp.ne.s32.totalorder %s124, %s127
      %p136 = scmp.eq.s32.totalorder %s18, 3
      %p137 = por %p135, %p136
      %p138 = scmp.ne.s32.totalorder %s127, %s128
      %p139 = scmp.eq.s32.totalorder %s18, 0
      %p140 = por %p138, %p139
      %p141 = scmp.ne.s32.totalorder %s127, %s128
      %p142 = scmp.eq.s32.totalorder %s19, 3
      %p143 = por %p141, %p142
      %p145 = scmp.ne.s32.totalorder %s128, %s144
      %p146 = scmp.eq.s32.totalorder %s19, 0
      %p147 = por %p145, %p146
      %s148 = ssub.s32 %s20, %s39
      %s149 = ssub.s32 %s21, %s35
      %s150 = sor.u32 %s148, %s149
      %p151 = scmp.eq.s32.totalorder %s150, 0
      %s153 = sadd.s32 %s152, 1
      %s154 = scalar_select %p151, %s152, %s153
      %p157 = pneg %p151
      %p158 = scmp.eq.s32.totalorder %s13, 3
      %p159 = por %p157, %p158
      %p160 = scmp.ne.s32.totalorder %s152, %s155
      %p161 = scmp.eq.s32.totalorder %s13, 0
      %p162 = por %p160, %p161
      %p163 = scmp.ne.s32.totalorder %s152, %s155
      %p164 = scmp.eq.s32.totalorder %s18, 3
      %p165 = por %p163, %p164
      %p166 = scmp.ne.s32.totalorder %s155, %s156
      %p167 = scmp.eq.s32.totalorder %s18, 0
      %p168 = por %p166, %p167
      %p169 = scmp.ne.s32.totalorder %s155, %s156
      %p170 = scmp.eq.s32.totalorder %s19, 3
      %p171 = por %p169, %p170
      %p173 = scmp.ne.s32.totalorder %s156, %s172
      %p174 = scmp.eq.s32.totalorder %s19, 0
      %p175 = por %p173, %p174
      %p176 = scmp.le.s32.totalorder 1, %s13
      %p177 = scmp.lt.s32.totalorder %s13, 5
      %p178 = pnand %p176, %p177
      %p179 = pneg %p178
      // Predicated region
      $region9: #{tpu_custom_call.1} parent=5 // pred_check
        _
      $region10: #{tpu_custom_call.1} parent=5 // pred_check_branch
        %181 = sbr.rel (%p178) target = $region12
      $region11: #{tpu_custom_call.1} parent=5 // pred_region
        %s182 = ssub.s32 %s13, 1
        // Predicated region
        $region13: #{tpu_custom_call.1} parent=11 // pred_check
          %p183 = pneg %p88
        $region14: #{tpu_custom_call.1} parent=11 // pred_check_branch
          %185 = sbr.rel (%p183) target = $region16
        $region15: #{tpu_custom_call.1} parent=11 // pred_region
          %p186 = scmp.lt.s32.totalorder %s25, 0
          %s187 = scalar_select %p186, %s25, 0
          %p188 = scmp.lt.s32.totalorder %s24, 0
          %s189 = scalar_select %p188, %s24, 0
          %s190 = sadd.s32 %s189, %s187
          %s191 = smul.addr %s190, 4
          %s192 = scalar_lea.vmem %s1, %s191
        $region16: #{tpu_custom_call.1} parent=11 // pred_fallthru
          _
        // Predicated region
        $region17: #{tpu_custom_call.1} parent=11 // pred_check
          %p193 = pneg %p114
        $region18: #{tpu_custom_call.1} parent=11 // pred_check_branch
          %195 = sbr.rel (%p193) target = $region20
        $region19: #{tpu_custom_call.1} parent=11 // pred_region
          %p196 = scmp.lt.s32.totalorder %s24, 0
          %s197 = scalar_select %p196, %s24, 0
          %s198 = scalar_lea.vmem %s2, %s197
        $region20: #{tpu_custom_call.1} parent=11 // pred_fallthru
          _
        // Predicated region
        $region21: #{tpu_custom_call.1} parent=11 // pred_check
          %p199 = pneg %p140
        $region22: #{tpu_custom_call.1} parent=11 // pred_check_branch
          %201 = sbr.rel (%p199) target = $region24
        $region23: #{tpu_custom_call.1} parent=11 // pred_region
          %p202 = scmp.lt.s32.totalorder %s24, 0
          %s203 = scalar_select %p202, %s24, 0
          %s204 = scalar_lea.vmem %s3, %s203
        $region24: #{tpu_custom_call.1} parent=11 // pred_fallthru
          _
      $region12: #{tpu_custom_call.1} parent=5 // pred_fallthru
        _
      %p205 = scmp.lt.s32.totalorder %s13, 4
      // Predicated region
      $region25: #{tpu_custom_call.1} parent=5 // pred_check
        %p206 = pneg %p205
      $region26: #{tpu_custom_call.1} parent=5 // pred_check_branch
        %208 = sbr.rel (%p206) target = $region28
      $region27: #{tpu_custom_call.1} parent=5 // pred_region
        // Predicated region
        $region29: #{tpu_custom_call.1} parent=27 // pred_check
          %p209 = pneg %p54
        $region30: #{tpu_custom_call.1} parent=27 // pred_check_branch
          %211 = sbr.rel (%p209) target = $region32
        $region31: #{tpu_custom_call.1} parent=27 // pred_region
          %s212 = smul.u32 16, %s20
          %p213 = scmp.lt.s32.totalorder %s212, 63
          %s214 = scalar_select %p213, %s212, 63
          %p215 = scmp.lt.s32.totalorder %s22, 0
          %s216 = scalar_select %p215, %s22, 0
          %s217 = sadd.s32 %s216, %s214
          %s218 = smul.addr %s217, 8
          %s219 = scalar_lea.vmem %s0, %s218
          %s220 = smul.u32 16, %s20
        $region32: #{tpu_custom_call.1} parent=27 // pred_fallthru
          _
      $region28: #{tpu_custom_call.1} parent=5 // pred_fallthru
        _
      %p221 = scmp.le.s32.totalorder 1, %s13
      %p222 = scmp.lt.s32.totalorder %s13, 5
      %p223 = pnand %p221, %p222
      %p224 = pneg %p223
      // Predicated region
      $region33: #{tpu_custom_call.1} parent=5 // pred_check
        _
      $region34: #{tpu_custom_call.1} parent=5 // pred_check_branch
        %226 = sbr.rel (%p223) target = $region36
      $region35: #{tpu_custom_call.1} parent=5 // pred_region
        %s227 = ssub.s32 %s13, 1
        %s228 = smul.u32 16, %s23
        %p229 = scmp.lt.s32.totalorder %s228, 63
        %s230 = scalar_select %p229, %s228, 63
        %p231 = scmp.lt.s32.totalorder %s25, 0
        %s232 = scalar_select %p231, %s25, 0
        %s233 = sadd.s32 %s232, %s230
        %s234 = smul.addr %s233, 8
        %s235 = scalar_lea.vmem %s0, %s234
        %p236 = pneg %p60
        %p237 = pneg %p57
        %p238 = scmp.lt.s32.totalorder %s25, 0
        %s239 = scalar_select %p238, %s25, 0
        %p240 = scmp.lt.s32.totalorder %s24, 0
        %s241 = scalar_select %p240, %s24, 0
        %s242 = sadd.s32 %s241, %s239
        %s243 = smul.addr %s242, 4
        %s244 = scalar_lea.vmem %s1, %s243
        %p245 = pneg %p88
        %p246 = pneg %p85
        %p247 = scmp.lt.s32.totalorder %s24, 0
        %s248 = scalar_select %p247, %s24, 0
        %s249 = scalar_lea.vmem %s2, %s248
        %p250 = pneg %p114
        %p251 = pneg %p111
        %p252 = scmp.lt.s32.totalorder %s24, 0
        %s253 = scalar_select %p252, %s24, 0
        %s254 = scalar_lea.vmem %s3, %s253
        %p255 = pneg %p140
        %p256 = pneg %p137
        %p257 = pneg %p168
        %p258 = pneg %p165
        %s259 = sand.u32 %s155, 1
        %s260 = scalar_lea.sflag [#allocation4], %s259
        %s261 = sand.u32 %s155, 1
        %s262 = smul.addr %s261, 128
        %s263 = scalar_lea.vmem [#allocation3], %s262
        %s264 = smul.u32 16, %s23
        %p265 = scmp.lt.s32.totalorder %s264, 63
        %s266 = scalar_select %p265, %s264, 63
        %p267 = scmp.lt.s32.totalorder %s25, 0
        %s268 = scalar_select %p267, %s25, 0
        %s269 = sadd.s32 %s268, %s266
        %s270 = smul.addr %s269, 8
        %s271 = scalar_lea.vmem %s0, %s270
        %s272 = smul.u32 16, %s23
        %p273 = scmp.lt.s32.totalorder %s25, 0
        %s274 = scalar_select %p273, %s25, 0
        %p275 = scmp.lt.s32.totalorder %s24, 0
        %s276 = scalar_select %p275, %s24, 0
        %s277 = sadd.s32 %s276, %s274
        %s278 = smul.addr %s277, 4
        %s279 = scalar_lea.vmem %s1, %s278
        %p280 = scmp.lt.s32.totalorder %s24, 0
        %s281 = scalar_select %p280, %s24, 0
        %s282 = scalar_lea.vmem %s2, %s281
        %p283 = scmp.lt.s32.totalorder %s24, 0
        %s284 = scalar_select %p283, %s24, 0
        %s285 = scalar_lea.vmem %s3, %s284
        %s286 = smul.u32 16, %s23
        %p287 = scmp.eq.s32.totalorder %s25, 0
        // Predicated region
        $region37: #{tpu_custom_call.1} parent=35 // pred_check
          %p288 = pneg %p287
        $region38: #{tpu_custom_call.1} parent=35 // pred_check_branch
          %290 = sbr.rel (%p288) target = $region40
        $region39: #{tpu_custom_call.1} parent=35 // pred_region
          %291 = vst [vmem:[#allocation2] sm:$0xff] 0.0
          %292 = vst [vmem:[#allocation2 + $0x8] sm:$0xff] 0.0
          %293 = vst [vmem:[#allocation2 + $0x10] sm:$0xff] 0.0
          %294 = vst [vmem:[#allocation2 + $0x18] sm:$0xff] 0.0
          %295 = vst [vmem:[#allocation2 + $0x20] sm:$0xff] 0.0
          %296 = vst [vmem:[#allocation2 + $0x28] sm:$0xff] 0.0
          %297 = vst [vmem:[#allocation2 + $0x30] sm:$0xff] 0.0
          %298 = vst [vmem:[#allocation2 + $0x38] sm:$0xff] 0.0
          %299 = vst [vmem:[#allocation2 + $0x40] sm:$0xff] 0.0
          %300 = vst [vmem:[#allocation2 + $0x48] sm:$0xff] 0.0
          %301 = vst [vmem:[#allocation2 + $0x50] sm:$0xff] 0.0
          %302 = vst [vmem:[#allocation2 + $0x58] sm:$0xff] 0.0
          %303 = vst [vmem:[#allocation2 + $0x60] sm:$0xff] 0.0
          %304 = vst [vmem:[#allocation2 + $0x68] sm:$0xff] 0.0
          %305 = vst [vmem:[#allocation2 + $0x70] sm:$0xff] 0.0
          %306 = vst [vmem:[#allocation2 + $0x78] sm:$0xff] 0.0
        $region40: #{tpu_custom_call.1} parent=35 // pred_fallthru
          _
        %v307 = vld [vmem:[#allocation2] sm:$0xff]
        %v308 = vld [vmem:[#allocation2 + $0x8] sm:$0xff]
        %v309 = vld [vmem:[#allocation2 + $0x10] sm:$0xff]
        %v310 = vld [vmem:[#allocation2 + $0x18] sm:$0xff]
        %v311 = vld [vmem:[#allocation2 + $0x20] sm:$0xff]
        %v312 = vld [vmem:[#allocation2 + $0x28] sm:$0xff]
        %v313 = vld [vmem:[#allocation2 + $0x30] sm:$0xff]
        %v314 = vld [vmem:[#allocation2 + $0x38] sm:$0xff]
        %v315 = vld [vmem:[#allocation2 + $0x40] sm:$0xff]
        %v316 = vld [vmem:[#allocation2 + $0x48] sm:$0xff]
        %v317 = vld [vmem:[#allocation2 + $0x50] sm:$0xff]
        %v318 = vld [vmem:[#allocation2 + $0x58] sm:$0xff]
        %v319 = vld [vmem:[#allocation2 + $0x60] sm:$0xff]
        %v320 = vld [vmem:[#allocation2 + $0x68] sm:$0xff]
        %v321 = vld [vmem:[#allocation2 + $0x70] sm:$0xff]
        %v322 = vld [vmem:[#allocation2 + $0x78] sm:$0xff]
        %v323 = vld [vmem:[%s271] sm:$0xff]
        %v324 = vld [vmem:[%s271 + $0x8] sm:$0xff]
        %v325 = vld [vmem:[%s271 + $0x10] sm:$0xff]
        %v326 = vld [vmem:[%s271 + $0x18] sm:$0xff]
        %v327 = vld [vmem:[%s271 + $0x20] sm:$0xff]
        %v328 = vld [vmem:[%s271 + $0x28] sm:$0xff]
        %v329 = vld [vmem:[%s271 + $0x30] sm:$0xff]
        %v330 = vld [vmem:[%s271 + $0x38] sm:$0xff]
        %v331 = vld [vmem:[%s271 + $0x40] sm:$0xff]
        %v332 = vld [vmem:[%s271 + $0x48] sm:$0xff]
        %v333 = vld [vmem:[%s271 + $0x50] sm:$0xff]
        %v334 = vld [vmem:[%s271 + $0x58] sm:$0xff]
        %v335 = vld [vmem:[%s271 + $0x60] sm:$0xff]
        %v336 = vld [vmem:[%s271 + $0x68] sm:$0xff]
        %v337 = vld [vmem:[%s271 + $0x70] sm:$0xff]
        %v338 = vld [vmem:[%s271 + $0x78] sm:$0xff]
        %v339 = vld [vmem:[%s279] sm:$0xf]
        %vm340 = vcmask 31744
        %v342 = vsel %vm340, %v323, 0
        %v345 = vsel %vm340, %v324, 0
        %v348 = vsel %vm340, %v325, 0
        %v351 = vsel %vm340, %v326, 0
        %v354 = vsel %vm340, %v327, 0
        %v357 = vsel %vm340, %v328, 0
        %v360 = vsel %vm340, %v329, 0
        %v363 = vsel %vm340, %v330, 0
        %v366 = vsel %vm340, %v331, 0
        %v369 = vsel %vm340, %v332, 0
        %v372 = vsel %vm340, %v333, 0
        %v375 = vsel %vm340, %v334, 0
        %v378 = vsel %vm340, %v335, 0
        %v381 = vsel %vm340, %v336, 0
        %v384 = vsel %vm340, %v337, 0
        %v387 = vsel %vm340, %v338, 0
        %vm389 = vcmask 1043456
        %v391 = vsel %vm389, %v339, 0
        %393 = vmatprep.subr.mxu0 0.0
        %394 = vmatpush1.msra.mxu0 %v391
        %395 = vmatprep.subr.mxu0 0.0
        %396 = vmatpush1.msra.mxu0 0.0
        %397 = vmatprep.subr.mxu0 0.0
        %398 = vmatpush1.msra.mxu0 0.0
        %399 = vmatprep.subr.mxu0 0.0
        %400 = vmatpush1.msra.mxu0 0.0
        %401 = vmatprep.subr.mxu0 0.0
        %402 = vmatpush1.msra.mxu0 0.0
        %403 = vmatprep.subr.mxu0 0.0
        %404 = vmatpush1.msra.mxu0 0.0
        %405 = vmatprep.subr.mxu0 0.0
        %406 = vmatpush1.msra.mxu0 0.0
        %407 = vmatprep.subr.mxu0 0.0
        %408 = vmatpush1.msra.mxu0 0.0
        %409 = vmatprep.subr.mxu0 0.0
        %410 = vmatpush1.msra.mxu0 0.0
        %411 = vmatprep.subr.mxu0 0.0
        %412 = vmatpush1.msra.mxu0 0.0
        %413 = vmatprep.subr.mxu0 0.0
        %414 = vmatpush1.msra.mxu0 0.0
        %415 = vmatprep.subr.mxu0 0.0
        %416 = vmatpush1.msra.mxu0 0.0
        %417 = vmatprep.subr.mxu0 0.0
        %418 = vmatpush1.msra.mxu0 0.0
        %419 = vmatprep.subr.mxu0 0.0
        %420 = vmatpush1.msra.mxu0 0.0
        %421 = vmatprep.subr.mxu0 0.0
        %422 = vmatpush1.msra.mxu0 0.0
        %423 = vmatprep.subr.mxu0 0.0
        %424 = vmatpush1.msra.mxu0 0.0
        %425 = vmatprep.subr.mxu0 0.0
        %426 = vmatpush1.msra.mxu0 0.0
        %427 = vmatprep.subr.mxu0 0.0
        %428 = vmatpush1.msra.mxu0 0.0
        %429 = vmatprep.subr.mxu0 0.0
        %430 = vmatpush1.msra.mxu0 0.0
        %431 = vmatprep.subr.mxu0 0.0
        %432 = vmatpush1.msra.mxu0 0.0
        %433 = vmatprep.subr.mxu0 0.0
        %434 = vmatpush1.msra.mxu0 0.0
        %435 = vmatprep.subr.mxu0 0.0
        %436 = vmatpush1.msra.mxu0 0.0
        %437 = vmatprep.subr.mxu0 0.0
        %438 = vmatpush1.msra.mxu0 0.0
        %439 = vmatprep.subr.mxu0 0.0
        %440 = vmatpush1.msra.mxu0 0.0
        %441 = vmatprep.subr.mxu0 0.0
        %442 = vmatpush1.msra.mxu0 0.0
        %443 = vmatprep.subr.mxu0 0.0
        %444 = vmatpush1.msra.mxu0 0.0
        %445 = vmatprep.subr.mxu0 0.0
        %446 = vmatpush1.msra.mxu0 0.0
        %447 = vmatprep.subr.mxu0 0.0
        %448 = vmatpush1.msra.mxu0 0.0
        %449 = vmatprep.subr.mxu0 0.0
        %450 = vmatpush1.msra.mxu0 0.0
        %451 = vmatprep.subr.mxu0 0.0
        %452 = vmatpush1.msra.mxu0 0.0
        %453 = vmatprep.subr.mxu0 0.0
        %454 = vmatpush1.msra.mxu0 0.0
        %455 = vmatprep.subr.mxu0 0.0
        %456 = vmatpush1.msra.mxu0 0.0
        %457 = vmatprep.mubr.f32.mxu0 0.0
        %458 = vmatmul.mubr.f32.gmra.mrb[0].mxu0 %v342
        %v459 = vpop.f32.mrb[0].mxu0
        %v460 = vadd.f32 0.0, %v459
        %v461 = vpop.f32.mrb[0].mxu0
        %462 = vmatprep.mubr.f32.mxu0 0.0
        %463 = vmatmul.mubr.f32.gmra.mrb[0].mxu0 %v345
        %v464 = vpop.f32.mrb[0].mxu0
        %v465 = vadd.f32 0.0, %v464
        %v466 = vpop.f32.mrb[0].mxu0
        %467 = vmatprep.mubr.f32.mxu0 0.0
        %468 = vmatmul.mubr.f32.gmra.mrb[0].mxu0 %v348
        %v469 = vpop.f32.mrb[0].mxu0
        %v470 = vadd.f32 0.0, %v469
        %v471 = vpop.f32.mrb[0].mxu0
        %472 = vmatprep.mubr.f32.mxu0 0.0
        %473 = vmatmul.mubr.f32.gmra.mrb[0].mxu0 %v351
        %v474 = vpop.f32.mrb[0].mxu0
        %v475 = vadd.f32 0.0, %v474
        %v476 = vpop.f32.mrb[0].mxu0
        %477 = vmatprep.mubr.f32.mxu0 0.0
        %478 = vmatmul.mubr.f32.gmra.mrb[0].mxu0 %v354
        %v479 = vpop.f32.mrb[0].mxu0
        %v480 = vadd.f32 0.0, %v479
        %v481 = vpop.f32.mrb[0].mxu0
        %482 = vmatprep.mubr.f32.mxu0 0.0
        %483 = vmatmul.mubr.f32.gmra.mrb[0].mxu0 %v357
        %v484 = vpop.f32.mrb[0].mxu0
        %v485 = vadd.f32 0.0, %v484
        %v486 = vpop.f32.mrb[0].mxu0
        %487 = vmatprep.mubr.f32.mxu0 0.0
        %488 = vmatmul.mubr.f32.gmra.mrb[0].mxu0 %v360
        %v489 = vpop.f32.mrb[0].mxu0
        %v490 = vadd.f32 0.0, %v489
        %v491 = vpop.f32.mrb[0].mxu0
        %492 = vmatprep.mubr.f32.mxu0 0.0
        %493 = vmatmul.mubr.f32.gmra.mrb[0].mxu0 %v363
        %v494 = vpop.f32.mrb[0].mxu0
        %v495 = vadd.f32 0.0, %v494
        %v496 = vpop.f32.mrb[0].mxu0
        %497 = vmatprep.mubr.f32.mxu0 0.0
        %498 = vmatmul.mubr.f32.gmra.mrb[0].mxu0 %v366
        %v499 = vpop.f32.mrb[0].mxu0
        %v500 = vadd.f32 0.0, %v499
        %v501 = vpop.f32.mrb[0].mxu0
        %502 = vmatprep.mubr.f32.mxu0 0.0
        %503 = vmatmul.mubr.f32.gmra.mrb[0].mxu0 %v369
        %v504 = vpop.f32.mrb[0].mxu0
        %v505 = vadd.f32 0.0, %v504
        %v506 = vpop.f32.mrb[0].mxu0
        %507 = vmatprep.mubr.f32.mxu0 0.0
        %508 = vmatmul.mubr.f32.gmra.mrb[0].mxu0 %v372
        %v509 = vpop.f32.mrb[0].mxu0
        %v510 = vadd.f32 0.0, %v509
        %v511 = vpop.f32.mrb[0].mxu0
        %512 = vmatprep.mubr.f32.mxu0 0.0
        %513 = vmatmul.mubr.f32.gmra.mrb[0].mxu0 %v375
        %v514 = vpop.f32.mrb[0].mxu0
        %v515 = vadd.f32 0.0, %v514
        %v516 = vpop.f32.mrb[0].mxu0
        %517 = vmatprep.mubr.f32.mxu0 0.0
        %518 = vmatmul.mubr.f32.gmra.mrb[0].mxu0 %v378
        %v519 = vpop.f32.mrb[0].mxu0
        %v520 = vadd.f32 0.0, %v519
        %v521 = vpop.f32.mrb[0].mxu0
        %522 = vmatprep.mubr.f32.mxu0 0.0
        %523 = vmatmul.mubr.f32.gmra.mrb[0].mxu0 %v381
        %v524 = vpop.f32.mrb[0].mxu0
        %v525 = vadd.f32 0.0, %v524
        %v526 = vpop.f32.mrb[0].mxu0
        %527 = vmatprep.mubr.f32.mxu0 0.0
        %528 = vmatmul.mubr.f32.gmra.mrb[0].mxu0 %v384
        %v529 = vpop.f32.mrb[0].mxu0
        %v530 = vadd.f32 0.0, %v529
        %v531 = vpop.f32.mrb[0].mxu0
        %532 = vmatprep.mubr.f32.mxu0 0.0
        %533 = vmatmul.mubr.f32.gmra.mrb[0].mxu0 %v387
        %v534 = vpop.f32.mrb[0].mxu0
        %v535 = vadd.f32 0.0, %v534
        %v536 = vpop.f32.mrb[0].mxu0
        %537 = vdwg.mxu0
        %v538 = vadd.f32 %v307, %v460
        %v539 = vadd.f32 %v308, %v465
        %v540 = vadd.f32 %v309, %v470
        %v541 = vadd.f32 %v310, %v475
        %v542 = vadd.f32 %v311, %v480
        %v543 = vadd.f32 %v312, %v485
        %v544 = vadd.f32 %v313, %v490
        %v545 = vadd.f32 %v314, %v495
        %v546 = vadd.f32 %v315, %v500
        %v547 = vadd.f32 %v316, %v505
        %v548 = vadd.f32 %v317, %v510
        %v549 = vadd.f32 %v318, %v515
        %v550 = vadd.f32 %v319, %v520
        %v551 = vadd.f32 %v320, %v525
        %v552 = vadd.f32 %v321, %v530
        %v553 = vadd.f32 %v322, %v535
        %554 = vst [vmem:[#allocation2] sm:$0xff] %v538
        %555 = vst [vmem:[#allocation2 + $0x8] sm:$0xff] %v539
        %556 = vst [vmem:[#allocation2 + $0x10] sm:$0xff] %v540
        %557 = vst [vmem:[#allocation2 + $0x18] sm:$0xff] %v541
        %558 = vst [vmem:[#allocation2 + $0x20] sm:$0xff] %v542
        %559 = vst [vmem:[#allocation2 + $0x28] sm:$0xff] %v543
        %560 = vst [vmem:[#allocation2 + $0x30] sm:$0xff] %v544
        %561 = vst [vmem:[#allocation2 + $0x38] sm:$0xff] %v545
        %562 = vst [vmem:[#allocation2 + $0x40] sm:$0xff] %v546
        %563 = vst [vmem:[#allocation2 + $0x48] sm:$0xff] %v547
        %564 = vst [vmem:[#allocation2 + $0x50] sm:$0xff] %v548
        %565 = vst [vmem:[#allocation2 + $0x58] sm:$0xff] %v549
        %566 = vst [vmem:[#allocation2 + $0x60] sm:$0xff] %v550
        %567 = vst [vmem:[#allocation2 + $0x68] sm:$0xff] %v551
        %568 = vst [vmem:[#allocation2 + $0x70] sm:$0xff] %v552
        %569 = vst [vmem:[#allocation2 + $0x78] sm:$0xff] %v553
        // Predicated region
        $region41: #{tpu_custom_call.1} parent=35 // pred_check
          %p570 = pneg %p287
        $region42: #{tpu_custom_call.1} parent=35 // pred_check_branch
          %572 = sbr.rel (%p570) target = $region44
        $region43: #{tpu_custom_call.1} parent=35 // pred_region
          %v573 = vld [vmem:[#allocation2] sm:$0xff]
          %v574 = vld [vmem:[#allocation2 + $0x8] sm:$0xff]
          %v575 = vld [vmem:[#allocation2 + $0x10] sm:$0xff]
          %v576 = vld [vmem:[#allocation2 + $0x18] sm:$0xff]
          %v577 = vld [vmem:[#allocation2 + $0x20] sm:$0xff]
          %v578 = vld [vmem:[#allocation2 + $0x28] sm:$0xff]
          %v579 = vld [vmem:[#allocation2 + $0x30] sm:$0xff]
          %v580 = vld [vmem:[#allocation2 + $0x38] sm:$0xff]
          %v581 = vld [vmem:[#allocation2 + $0x40] sm:$0xff]
          %v582 = vld [vmem:[#allocation2 + $0x48] sm:$0xff]
          %v583 = vld [vmem:[#allocation2 + $0x50] sm:$0xff]
          %v584 = vld [vmem:[#allocation2 + $0x58] sm:$0xff]
          %v585 = vld [vmem:[#allocation2 + $0x60] sm:$0xff]
          %v586 = vld [vmem:[#allocation2 + $0x68] sm:$0xff]
          %v587 = vld [vmem:[#allocation2 + $0x70] sm:$0xff]
          %v588 = vld [vmem:[#allocation2 + $0x78] sm:$0xff]
          %v589 = vld [vmem:[%s282] sm:$0x1]
          %v591 = vlaneseq
          %v592 = vshrl.u32 %v591, 7
          %v593 = vsub.s32 0, %v592
          %v594 = vrot.slane %v589, %v593
          %v596 = vmul.f32 %v573, %v594
          %v597 = vmul.f32 %v574, %v594
          %v598 = vmul.f32 %v575, %v594
          %v599 = vmul.f32 %v576, %v594
          %v600 = vmul.f32 %v577, %v594
          %v601 = vmul.f32 %v578, %v594
          %v602 = vmul.f32 %v579, %v594
          %v603 = vmul.f32 %v580, %v594
          %v604 = vmul.f32 %v581, %v594
          %v605 = vmul.f32 %v582, %v594
          %v606 = vmul.f32 %v583, %v594
          %v607 = vmul.f32 %v584, %v594
          %v608 = vmul.f32 %v585, %v594
          %v609 = vmul.f32 %v586, %v594
          %v610 = vmul.f32 %v587, %v594
          %v611 = vmul.f32 %v588, %v594
          %v612 = vld [vmem:[%s285] sm:$0x1]
          %v614 = vlaneseq
          %v615 = vshrl.u32 %v614, 7
          %v616 = vsub.s32 0, %v615
          %v617 = vrot.slane %v612, %v616
          %v619 = vadd.f32 %v596, %v617
          %v620 = vadd.f32 %v597, %v617
          %v621 = vadd.f32 %v598, %v617
          %v622 = vadd.f32 %v599, %v617
          %v623 = vadd.f32 %v600, %v617
          %v624 = vadd.f32 %v601, %v617
          %v625 = vadd.f32 %v602, %v617
          %v626 = vadd.f32 %v603, %v617
          %v627 = vadd.f32 %v604, %v617
          %v628 = vadd.f32 %v605, %v617
          %v629 = vadd.f32 %v606, %v617
          %v630 = vadd.f32 %v607, %v617
          %v631 = vadd.f32 %v608, %v617
          %v632 = vadd.f32 %v609, %v617
          %v633 = vadd.f32 %v610, %v617
          %v634 = vadd.f32 %v611, %v617
          %v635 = vxor.u32 %v619, 2147483648
          %v636 = vxor.u32 %v620, 2147483648
          %v637 = vxor.u32 %v621, 2147483648
          %v638 = vxor.u32 %v622, 2147483648
          %v639 = vxor.u32 %v623, 2147483648
          %v640 = vxor.u32 %v624, 2147483648
          %v641 = vxor.u32 %v625, 2147483648
          %v642 = vxor.u32 %v626, 2147483648
          %v643 = vxor.u32 %v627, 2147483648
          %v644 = vxor.u32 %v628, 2147483648
          %v645 = vxor.u32 %v629, 2147483648
          %v646 = vxor.u32 %v630, 2147483648
          %v647 = vxor.u32 %v631, 2147483648
          %v648 = vxor.u32 %v632, 2147483648
          %v649 = vxor.u32 %v633, 2147483648
          %v650 = vxor.u32 %v634, 2147483648
          %v651 = vmul.f32 %v635, 1.442695
          %v652 = vpow.pop %v651
          %v653 = vmul.f32 %v636, 1.442695
          %v654 = vpow.pop %v653
          %v655 = vmul.f32 %v637, 1.442695
          %v656 = vpow.pop %v655
          %v657 = vmul.f32 %v638, 1.442695
          %v658 = vpow.pop %v657
          %v659 = vmul.f32 %v639, 1.442695
          %v660 = vpow.pop %v659
          %v661 = vmul.f32 %v640, 1.442695
          %v662 = vpow.pop %v661
          %v663 = vmul.f32 %v641, 1.442695
          %v664 = vpow.pop %v663
          %v665 = vmul.f32 %v642, 1.442695
          %v666 = vpow.pop %v665
          %v667 = vmul.f32 %v643, 1.442695
          %v668 = vpow.pop %v667
          %v669 = vmul.f32 %v644, 1.442695
          %v670 = vpow.pop %v669
          %v671 = vmul.f32 %v645, 1.442695
          %v672 = vpow.pop %v671
          %v673 = vmul.f32 %v646, 1.442695
          %v674 = vpow.pop %v673
          %v675 = vmul.f32 %v647, 1.442695
          %v676 = vpow.pop %v675
          %v677 = vmul.f32 %v648, 1.442695
          %v678 = vpow.pop %v677
          %v679 = vmul.f32 %v649, 1.442695
          %v680 = vpow.pop %v679
          %v681 = vmul.f32 %v650, 1.442695
          %v682 = vpow.pop %v681
          %v683 = vadd.f32 %v652, 1.0
          %v684 = vadd.f32 %v654, 1.0
          %v685 = vadd.f32 %v656, 1.0
          %v686 = vadd.f32 %v658, 1.0
          %v687 = vadd.f32 %v660, 1.0
          %v688 = vadd.f32 %v662, 1.0
          %v689 = vadd.f32 %v664, 1.0
          %v690 = vadd.f32 %v666, 1.0
          %v691 = vadd.f32 %v668, 1.0
          %v692 = vadd.f32 %v670, 1.0
          %v693 = vadd.f32 %v672, 1.0
          %v694 = vadd.f32 %v674, 1.0
          %v695 = vadd.f32 %v676, 1.0
          %v696 = vadd.f32 %v678, 1.0
          %v697 = vadd.f32 %v680, 1.0
          %v698 = vadd.f32 %v682, 1.0
          %v699 = vrcp.pop %v683
          %v700 = vmul.f32 1.0, %v699
          %v701 = vrcp.pop %v684
          %v702 = vmul.f32 1.0, %v701
          %v703 = vrcp.pop %v685
          %v704 = vmul.f32 1.0, %v703
          %v705 = vrcp.pop %v686
          %v706 = vmul.f32 1.0, %v705
          %v707 = vrcp.pop %v687
          %v708 = vmul.f32 1.0, %v707
          %v709 = vrcp.pop %v688
          %v710 = vmul.f32 1.0, %v709
          %v711 = vrcp.pop %v689
          %v712 = vmul.f32 1.0, %v711
          %v713 = vrcp.pop %v690
          %v714 = vmul.f32 1.0, %v713
          %v715 = vrcp.pop %v691
          %v716 = vmul.f32 1.0, %v715
          %v717 = vrcp.pop %v692
          %v718 = vmul.f32 1.0, %v717
          %v719 = vrcp.pop %v693
          %v720 = vmul.f32 1.0, %v719
          %v721 = vrcp.pop %v694
          %v722 = vmul.f32 1.0, %v721
          %v723 = vrcp.pop %v695
          %v724 = vmul.f32 1.0, %v723
          %v725 = vrcp.pop %v696
          %v726 = vmul.f32 1.0, %v725
          %v727 = vrcp.pop %v697
          %v728 = vmul.f32 1.0, %v727
          %v729 = vrcp.pop %v698
          %v730 = vmul.f32 1.0, %v729
          %v731 = vmul.f32 %v619, %v700
          %v732 = vmul.f32 %v620, %v702
          %v733 = vmul.f32 %v621, %v704
          %v734 = vmul.f32 %v622, %v706
          %v735 = vmul.f32 %v623, %v708
          %v736 = vmul.f32 %v624, %v710
          %v737 = vmul.f32 %v625, %v712
          %v738 = vmul.f32 %v626, %v714
          %v739 = vmul.f32 %v627, %v716
          %v740 = vmul.f32 %v628, %v718
          %v741 = vmul.f32 %v629, %v720
          %v742 = vmul.f32 %v630, %v722
          %v743 = vmul.f32 %v631, %v724
          %v744 = vmul.f32 %v632, %v726
          %v745 = vmul.f32 %v633, %v728
          %v746 = vmul.f32 %v634, %v730
          %747 = vst [vmem:[%s263] sm:$0xff] %v731
          %748 = vst [vmem:[%s263 + $0x8] sm:$0xff] %v732
          %749 = vst [vmem:[%s263 + $0x10] sm:$0xff] %v733
          %750 = vst [vmem:[%s263 + $0x18] sm:$0xff] %v734
          %751 = vst [vmem:[%s263 + $0x20] sm:$0xff] %v735
          %752 = vst [vmem:[%s263 + $0x28] sm:$0xff] %v736
          %753 = vst [vmem:[%s263 + $0x30] sm:$0xff] %v737
          %754 = vst [vmem:[%s263 + $0x38] sm:$0xff] %v738
          %755 = vst [vmem:[%s263 + $0x40] sm:$0xff] %v739
          %756 = vst [vmem:[%s263 + $0x48] sm:$0xff] %v740
          %757 = vst [vmem:[%s263 + $0x50] sm:$0xff] %v741
          %758 = vst [vmem:[%s263 + $0x58] sm:$0xff] %v742
          %759 = vst [vmem:[%s263 + $0x60] sm:$0xff] %v743
          %760 = vst [vmem:[%s263 + $0x68] sm:$0xff] %v744
          %761 = vst [vmem:[%s263 + $0x70] sm:$0xff] %v745
          %762 = vst [vmem:[%s263 + $0x78] sm:$0xff] %v746
        $region44: #{tpu_custom_call.1} parent=35 // pred_fallthru
          _
        %s763 = sand.u32 %s155, 1
        %s764 = scalar_lea.sflag [#allocation4], %s763
        %s765 = sand.u32 %s155, 1
        %s766 = smul.addr %s765, 128
        %s767 = scalar_lea.vmem [#allocation3], %s766
        // Predicated region
        $region45: #{tpu_custom_call.1} parent=35 // pred_check
          %p768 = pneg %p165
        $region46: #{tpu_custom_call.1} parent=35 // pred_check_branch
          %770 = sbr.rel (%p768) target = $region48
        $region47: #{tpu_custom_call.1} parent=35 // pred_region
          %s771 = smul.u32 16, %s23
          %s773 = ssub.s32 2048, 2048
          %774 = vsyncadd %s764, %s773
          %s775 = sadd.s32 %s24, %s771
          %s776 = smul.addr %s775, 128
          %s777 = scalar_lea.hbm %s4, %s776
          %s778 = sshll.u32 %s767, 4
          %s779 = int_to_ptr.vmem [resolvable:$true] %s778
          %784 = dma.vmem_to_hbm [thread:$0]  %s779, 2048, %s777, %s764, 128, 128, 8
        $region48: #{tpu_custom_call.1} parent=35 // pred_fallthru
          _
      $region36: #{tpu_custom_call.1} parent=5 // pred_fallthru
        _
      %p785 = scmp.le.s32.totalorder 2, %s13
      // Predicated region
      $region49: #{tpu_custom_call.1} parent=5 // pred_check
        %p786 = pneg %p785
      $region50: #{tpu_custom_call.1} parent=5 // pred_check_branch
        %788 = sbr.rel (%p786) target = $region52
      $region51: #{tpu_custom_call.1} parent=5 // pred_region
        %s789 = ssub.s32 %s13, 2
        // Predicated region
        $region53: #{tpu_custom_call.1} parent=51 // pred_check
          %p790 = pneg %p171
        $region54: #{tpu_custom_call.1} parent=51 // pred_check_branch
          %792 = sbr.rel (%p790) target = $region56
        $region55: #{tpu_custom_call.1} parent=51 // pred_region
          %s793 = sand.u32 %s156, 1
          %s794 = scalar_lea.sflag [#allocation4], %s793
          %s795 = sand.u32 %s156, 1
          %s796 = smul.addr %s795, 128
          %s797 = scalar_lea.vmem [#allocation3], %s796
          %798 = dma.done %s794, 2048
        $region56: #{tpu_custom_call.1} parent=51 // pred_fallthru
          _
      $region52: #{tpu_custom_call.1} parent=5 // pred_fallthru
        _
    $region6: #{tpu_custom_call.1} parent=1 // loop_footer
      %s17 = sadd.s32 1, %s13
    $region7: #{tpu_custom_call.1} parent=1 // loop_footer_branch
      %12 = sbr.rel target = $region3
    $region8: #{tpu_custom_call.1} parent=1 // loop_exit
      _
    %799 = vsyncpa [#allocation4], 1
    %s800 = scalar_lea.sflag [#allocation4], 1
    %801 = vsyncpa %s800, 1

</llo_original>
